<compile_context>
chip_gen: v5e
topology: v5e:2x2
jax: 0.10.0
libtpu: 0.0.40
codegen_flags: <defaults>
</compile_context>

<pallas_src>
import jax
import jax.numpy as jnp
from jax import lax
from jax.experimental import pallas as pl
from jax.experimental.pallas import tpu as pltpu

EPS = 1e-5


def _cdiv(a, b):
    return -(-a // b)


def _round_up(a, b):
    return ((a + b - 1) // b) * b


# ---------------------------------------------------------------------------
# Kernels
# ---------------------------------------------------------------------------

def _ln_rowwise_kernel(x_ref, w_ref, o_ref):
    """pack == 1: plain per-row LayerNorm over the lane axis (no bias)."""
    xf = x_ref[...].astype(jnp.float32)
    hidden = xf.shape[-1]
    mean = jnp.sum(xf, axis=-1, keepdims=True) * (1.0 / hidden)
    d = xf - mean
    var = jnp.sum(d * d, axis=-1, keepdims=True) * (1.0 / hidden)
    inv = lax.rsqrt(var + EPS)
    o_ref[...] = (d * inv * w_ref[...].astype(jnp.float32)).astype(o_ref.dtype)


def _ln_rowwise_bias_kernel(x_ref, w_ref, b_ref, o_ref):
    xf = x_ref[...].astype(jnp.float32)
    hidden = xf.shape[-1]
    mean = jnp.sum(xf, axis=-1, keepdims=True) * (1.0 / hidden)
    d = xf - mean
    var = jnp.sum(d * d, axis=-1, keepdims=True) * (1.0 / hidden)
    inv = lax.rsqrt(var + EPS)
    y = d * inv * w_ref[...].astype(jnp.float32) + b_ref[...].astype(jnp.float32)
    o_ref[...] = y.astype(o_ref.dtype)


def _packed_mean(x_raw, xf, segr):
    """Per-segment mean for the lane-packed layout (1/H folded into segr)."""
    if x_raw.dtype == jnp.bfloat16:
        # bf16 LHS halves the MXU stream on v6e/v7x; accumulation stays f32.
        return jnp.dot(x_raw, segr.astype(jnp.bfloat16),
                       preferred_element_type=jnp.float32)
    return jnp.dot(xf, segr, preferred_element_type=jnp.float32)


def _ln_packed_kernel(x_ref, segr_ref, bt_ref, wt_ref, o_ref):
    """pack > 1: `pack` logical rows packed into each 128-lane vreg row.

    segr: (lanes, pack) segment-sum matrix with 1/H folded in.
    bt:   (pack, lanes) 0/1 broadcast-back matrix.
    wt:   (pack, lanes) broadcast-back matrix with the LayerNorm weight folded.
    """
    x_raw = x_ref[...]
    xf = x_raw.astype(jnp.float32)
    segr = segr_ref[...]
    mean = _packed_mean(x_raw, xf, segr)                                   # (tr, pack)
    mean_b = jnp.dot(mean, bt_ref[...], preferred_element_type=jnp.float32)
    d = xf - mean_b
    var = jnp.dot(d * d, segr, preferred_element_type=jnp.float32)        # (tr, pack)
    inv = lax.rsqrt(var + EPS)
    invw_b = jnp.dot(inv, wt_ref[...], preferred_element_type=jnp.float32)
    o_ref[...] = (d * invw_b).astype(o_ref.dtype)


def _ln_packed_bias_kernel(x_ref, segr_ref, bt_ref, wt_ref, b_ref, o_ref):
    x_raw = x_ref[...]
    xf = x_raw.astype(jnp.float32)
    segr = segr_ref[...]
    mean = _packed_mean(x_raw, xf, segr)
    mean_b = jnp.dot(mean, bt_ref[...], preferred_element_type=jnp.float32)
    d = xf - mean_b
    var = jnp.dot(d * d, segr, preferred_element_type=jnp.float32)
    inv = lax.rsqrt(var + EPS)
    invw_b = jnp.dot(inv, wt_ref[...], preferred_element_type=jnp.float32)
    y = d * invw_b + b_ref[...].astype(jnp.float32)
    o_ref[...] = y.astype(o_ref.dtype)


# ---------------------------------------------------------------------------
# Wrapper
# ---------------------------------------------------------------------------

def _pick_row_tile(R, lanes, dsize, sub, max_rows_per_block):
    """Pick the row-tile size and vmem_limit from the chip generation."""
    try:
        vmem_cap = getattr(pltpu.get_tpu_info(), "vmem_capacity_bytes", None)
    except Exception:  # pragma: no cover - conservative fallback
        vmem_cap = None
    if vmem_cap and vmem_cap >= 96 * 1024 * 1024:      # v5e / v6e (128 MiB)
        budget, vmem_limit = 48 * 1024 * 1024, 64 * 1024 * 1024
    else:                                              # v7x (64 MiB) or unknown
        budget, vmem_limit = 36 * 1024 * 1024, 48 * 1024 * 1024

    # Double-buffered input + output tiles plus ~4 f32 full-tile temporaries.
    per_row_bytes = lanes * (4 * dsize + 16)
    tr = (budget // per_row_bytes) // sub * sub
    tr = max(sub, min(tr, 8192))
    if max_rows_per_block is not None:
        tr = min(tr, max(sub, (max_rows_per_block // sub) * sub))
    # Keep >= 8 grid blocks (>= 4 per v7x TensorCore) when each block would
    # still have >= ~1024 rows to amortize the ~0.35 us per-step overhead.
    if R >= 8 * 1024:
        tr = min(tr, _round_up(_cdiv(R, 8), sub))
    if tr >= R:
        tr = R        # single full-extent block (allowed even if not 8-aligned)
    return tr, vmem_limit


def _layer_norm_ref(x, weight, bias=None):
    xf = x.astype(jnp.float32)
    mean = jnp.mean(xf, axis=-1, keepdims=True)
    var = jnp.mean((xf - mean) ** 2, axis=-1, keepdims=True)
    y = (xf - mean) * lax.rsqrt(var + EPS) * weight.astype(jnp.float32)
    if bias is not None:
        y = y + bias.astype(jnp.float32)
    return y.astype(x.dtype)


def layer_norm(x, weight, bias=None, *, fallback_rows=0, max_rows_per_block=None):
    """LayerNorm over the last axis of x (torch F.layer_norm semantics).

    x: (..., H); weight: (H,); bias: (H,) or None.
    fallback_rows: if > 0 and the row count (prod of leading dims) is at most
        this value, a pure-JAX path is used instead of pallas_call (for
        launch-overhead-dominated callers such as BlockRNN's 16x32 LayerNorms).
    max_rows_per_block: optional row-tile override (testing / tuning hook).
    """
    orig_shape = x.shape
    H = int(orig_shape[-1])
    rows = 1
    for d in orig_shape[:-1]:
        rows *= int(d)

    if fallback_rows and rows <= fallback_rows:
        return _layer_norm_ref(x, weight, bias)

    x2 = x.reshape(rows, H)

    # Pack rows into the 128-lane dimension when H is a small divisor of 128.
    pack = (128 // H) if (H < 128 and 128 % H == 0) else 1
    lanes = pack * H

    if pack > 1:
        R = _cdiv(rows, pack)
        pad_rows = R * pack - rows          # <= pack - 1 rows, usually 0
        if pad_rows:
            x2 = jnp.pad(x2, ((0, pad_rows), (0, 0)))
        xp = x2.reshape(R, lanes)
    else:
        R = rows
        pad_rows = 0
        xp = x2

    dsize = jnp.dtype(x.dtype).itemsize
    sub = 16 if dsize == 2 else (32 if dsize == 1 else 8)
    tr, vmem_limit = _pick_row_tile(R, lanes, dsize, sub, max_rows_per_block)
    grid = (_cdiv(R, tr),)   # non-divisible grid: Pallas masks the tail block

    wf = weight.astype(jnp.float32)

    if pack > 1:
        lane = jnp.arange(lanes, dtype=jnp.int32)
        onehot = (lane[:, None] // H ==
                  jnp.arange(pack, dtype=jnp.int32)[None, :]).astype(jnp.float32)
        segr = onehot * (1.0 / H)                 # (lanes, pack), 1/H folded in
        bt = onehot.T                             # (pack, lanes)
        wt = bt * jnp.tile(wf, pack)[None, :]     # weight folded in
        args = [xp, segr, bt, wt]
        in_specs = [
            pl.BlockSpec((tr, lanes), lambda i: (i, 0)),
            pl.BlockSpec((lanes, pack), lambda i: (0, 0)),
            pl.BlockSpec((pack, lanes), lambda i: (0, 0)),
            pl.BlockSpec((pack, lanes), lambda i: (0, 0)),
        ]
        if bias is not None:
            args.append(jnp.tile(bias.astype(jnp.float32), pack).reshape(1, lanes))
            in_specs.append(pl.BlockSpec((1, lanes), lambda i: (0, 0)))
            kernel = _ln_packed_bias_kernel
        else:
            kernel = _ln_packed_kernel
        # 2 reduce + 2 broadcast-back matmuls per packed row + ~4 VPU passes.
        flops = int(R) * (8 * lanes * pack + 4 * lanes)
    else:
        args = [xp, wf.reshape(1, lanes)]
        in_specs = [
            pl.BlockSpec((tr, lanes), lambda i: (i, 0)),
            pl.BlockSpec((1, lanes), lambda i: (0, 0)),
        ]
        if bias is not None:
            args.append(bias.astype(jnp.float32).reshape(1, lanes))
            in_specs.append(pl.BlockSpec((1, lanes), lambda i: (0, 0)))
            kernel = _ln_rowwise_bias_kernel
        else:
            kernel = _ln_rowwise_kernel
        flops = 8 * rows * H

    cost = pl.CostEstimate(
        flops=int(flops),
        transcendentals=int(rows),
        bytes_accessed=int(2 * rows * H * dsize + (3 * pack + 2) * lanes * 4),
    )

    out = pl.pallas_call(
        kernel,
        out_shape=jax.ShapeDtypeStruct((R, lanes), x.dtype),
        grid_spec=pltpu.PrefetchScalarGridSpec(
            num_scalar_prefetch=0,
            grid=grid,
            in_specs=in_specs,
            out_specs=pl.BlockSpec((tr, lanes), lambda i: (i, 0)),
        ),
        compiler_params=pltpu.CompilerParams(
            dimension_semantics=("parallel",),
            vmem_limit_bytes=int(vmem_limit),
        ),
        cost_estimate=cost,
    )(*args)

    if pack > 1:
        out = out.reshape(R * pack, H)
        if pad_rows:
            out = out[:rows]
    return out.reshape(orig_shape)


if __name__ == "__main__":
    key = jax.random.PRNGKey(0)
    k1, k2, k3, k4, k5 = jax.random.split(key, 5)

    # Case 1: BlockRNN's LayerNorm(embedding_dim=32, bias=False) at its actual
    # shapes (batch=2, seq=8, hidden=32).  Exercises the packed lane path.
    B, T, H = 2, 8, 32
    x = jax.random.normal(k1, (B, T, H), dtype=jnp.float32)
    w_ones = jnp.ones((H,), dtype=jnp.float32)
    out = jax.block_until_ready(layer_norm(x, w_ones, None))
    ref = _layer_norm_ref(x, w_ones, None)
    assert jnp.allclose(out, ref, atol=3e-5, rtol=3e-5), "mismatch (no-bias, H=32)"

    # Case 2: bias path with non-trivial params (packed path).
    w2 = 1.0 + 0.1 * jax.random.normal(k2, (H,), dtype=jnp.float32)
    b2 = 0.1 * jax.random.normal(k3, (H,), dtype=jnp.float32)
    out2 = jax.block_until_ready(layer_norm(x, w2, b2))
    ref2 = _layer_norm_ref(x, w2, b2)
    assert jnp.allclose(out2, ref2, atol=3e-5, rtol=3e-5), "mismatch (bias, H=32)"

    # Case 3: H multiple of 128 (row-wise path), row count not a multiple of 8.
    x3 = jax.random.normal(k4, (3, 5, 256), dtype=jnp.float32)
    w3 = jnp.ones((256,), dtype=jnp.float32)
    out3 = jax.block_until_ready(layer_norm(x3, w3, None))
    ref3 = _layer_norm_ref(x3, w3, None)
    assert jnp.allclose(out3, ref3, atol=3e-5, rtol=3e-5), "mismatch (no-bias, H=256)"

    # Case 4: multi-block non-divisible grid + lane-pack row padding
    # (rows = 50*63 = 3150, pack = 4 -> R = 788 = 3*256 + 20 with tr = 256).
    x4 = jax.random.normal(k5, (50, 63, H), dtype=jnp.float32)
    out4 = jax.block_until_ready(layer_norm(x4, w2, b2, max_rows_per_block=256))
    ref4 = _layer_norm_ref(x4, w2, b2)
    assert jnp.allclose(out4, ref4, atol=3e-5, rtol=3e-5), "mismatch (multi-block)"

    # Case 5: bf16 input exercises the bf16 MXU path for the mean reduction.
    x5 = x.astype(jnp.bfloat16)
    out5 = jax.block_until_ready(layer_norm(x5, w2, b2))
    ref5 = _layer_norm_ref(x5, w2, b2)
    assert jnp.allclose(out5.astype(jnp.float32), ref5.astype(jnp.float32),
                        atol=2e-2, rtol=2e-2), "mismatch (bf16)"

    # Case 6: small-input pure-JAX fast path (what BlockRNN itself would use).
    out6 = jax.block_until_ready(layer_norm(x, w2, b2, fallback_rows=256))
    assert jnp.allclose(out6, ref2, atol=3e-5, rtol=3e-5), "mismatch (fast path)"

    print("KERNEL_OK")
</pallas_src>

<mosaic_0001>
module attributes {stable_mosaic.version = 11 : i64} {
  func.func @_ln_packed_kernel(%arg0: i32, %arg1: memref<4x128xf32, #tpu.memory_space<vmem>>, %arg2: memref<128x4xf32, #tpu.memory_space<vmem>>, %arg3: memref<4x128xf32, #tpu.memory_space<vmem>>, %arg4: memref<4x128xf32, #tpu.memory_space<vmem>>, %arg5: memref<4x128xf32, #tpu.memory_space<vmem>>) attributes {dimension_semantics = [#tpu.dimension_semantics<parallel>], iteration_bounds = array<i64: 1>, scalar_prefetch = 0 : i64, scratch_operands = 0 : i64, tpu.core_type = #tpu.core_type<tc>, window_params = [{transform_indices = @transform_0, window_bounds = array<i64: 4, 128>}, {pipeline_mode = #tpu.pipeline_mode<synchronous>, transform_indices = @transform_1, window_bounds = array<i64: 128, 4>}, {pipeline_mode = #tpu.pipeline_mode<synchronous>, transform_indices = @transform_2, window_bounds = array<i64: 4, 128>}, {pipeline_mode = #tpu.pipeline_mode<synchronous>, transform_indices = @transform_3, window_bounds = array<i64: 4, 128>}, {transform_indices = @transform_4, window_bounds = array<i64: 4, 128>}]} {
    %c0 = arith.constant 0 : index
    %c0_0 = arith.constant 0 : index
    %0 = vector.load %arg1[%c0, %c0_0] : memref<4x128xf32, #tpu.memory_space<vmem>>, vector<4x128xf32>
    %c0_1 = arith.constant 0 : index
    %c0_2 = arith.constant 0 : index
    %1 = vector.load %arg2[%c0_1, %c0_2] : memref<128x4xf32, #tpu.memory_space<vmem>>, vector<128x4xf32>
    %cst = arith.constant dense<0.000000e+00> : vector<4x4xf32>
    %2 = tpu.matmul %0, %1, %cst {dimension_numbers = #tpu.dot_dimension_numbers<[1], [0], [0], [1], [0, 0, 1, 1], [], []>} : vector<4x128xf32>, vector<128x4xf32>, vector<4x4xf32> -> vector<4x4xf32>
    %c0_3 = arith.constant 0 : index
    %c0_4 = arith.constant 0 : index
    %3 = vector.load %arg3[%c0_3, %c0_4] : memref<4x128xf32, #tpu.memory_space<vmem>>, vector<4x128xf32>
    %cst_5 = arith.constant dense<0.000000e+00> : vector<4x128xf32>
    %4 = tpu.matmul %2, %3, %cst_5 {dimension_numbers = #tpu.dot_dimension_numbers<[1], [0], [0], [1], [0, 0, 1, 1], [], []>} : vector<4x4xf32>, vector<4x128xf32>, vector<4x128xf32> -> vector<4x128xf32>
    %5 = arith.subf %0, %4 : vector<4x128xf32>
    %6 = arith.mulf %5, %5 : vector<4x128xf32>
    %cst_6 = arith.constant dense<0.000000e+00> : vector<4x4xf32>
    %7 = tpu.matmul %6, %1, %cst_6 {dimension_numbers = #tpu.dot_dimension_numbers<[1], [0], [0], [1], [0, 0, 1, 1], [], []>} : vector<4x128xf32>, vector<128x4xf32>, vector<4x4xf32> -> vector<4x4xf32>
    %cst_7 = arith.constant 9.99999974E-6 : f32
    %8 = vector.broadcast %cst_7 : f32 to vector<4x4xf32>
    %9 = arith.addf %7, %8 : vector<4x4xf32>
    %10 = math.rsqrt %9 : vector<4x4xf32>
    %c0_8 = arith.constant 0 : index
    %c0_9 = arith.constant 0 : index
    %11 = vector.load %arg4[%c0_8, %c0_9] : memref<4x128xf32, #tpu.memory_space<vmem>>, vector<4x128xf32>
    %cst_10 = arith.constant dense<0.000000e+00> : vector<4x128xf32>
    %12 = tpu.matmul %10, %11, %cst_10 {dimension_numbers = #tpu.dot_dimension_numbers<[1], [0], [0], [1], [0, 0, 1, 1], [], []>} : vector<4x4xf32>, vector<4x128xf32>, vector<4x128xf32> -> vector<4x128xf32>
    %13 = arith.mulf %5, %12 : vector<4x128xf32>
    %c0_11 = arith.constant 0 : index
    %c0_12 = arith.constant 0 : index
    %14 = vector.load %arg5[%c0_11, %c0_12] : memref<4x128xf32, #tpu.memory_space<vmem>>, vector<4x128xf32>
    tpu.vector_store %arg5[%c0_11, %c0_12], %13 {strides = array<i32>} : memref<4x128xf32, #tpu.memory_space<vmem>>, vector<4x128xf32>,
    return
  }
  func.func @transform_0(%arg0: i32) -> (i32, i32) {
    %c0_i32 = arith.constant 0 : i32
    %c0_i32_0 = arith.constant 0 : i32
    return %arg0, %c0_i32 : i32, i32
  }
  func.func @transform_1(%arg0: i32) -> (i32, i32) {
    %c0_i32 = arith.constant 0 : i32
    %c0_i32_0 = arith.constant 0 : i32
    %c0_i32_1 = arith.constant 0 : i32
    return %c0_i32, %c0_i32_0 : i32, i32
  }
  func.func @transform_2(%arg0: i32) -> (i32, i32) {
    %c0_i32 = arith.constant 0 : i32
    %c0_i32_0 = arith.constant 0 : i32
    %c0_i32_1 = arith.constant 0 : i32
    return %c0_i32, %c0_i32_0 : i32, i32
  }
  func.func @transform_3(%arg0: i32) -> (i32, i32) {
    %c0_i32 = arith.constant 0 : i32
    %c0_i32_0 = arith.constant 0 : i32
    %c0_i32_1 = arith.constant 0 : i32
    return %c0_i32, %c0_i32_0 : i32, i32
  }
  func.func @transform_4(%arg0: i32) -> (i32, i32) {
    %c0_i32 = arith.constant 0 : i32
    %c0_i32_0 = arith.constant 0 : i32
    return %arg0, %c0_i32 : i32, i32
  }
}

</mosaic_0001>

<llo_original>
// kernel: tpu_custom_call.1
$region0: #{tpu_custom_call.1}
  #allocation0 [shape = 'u32[]', space=smem, size = 0x4, offset = 0x4, fixed_abs, tag = 'smem constant byte address 0x4 - core index']
  #allocation1 [shape = 'u32[72,128]{1,0:T(1,128)}', space=vmem, size = 0x9000, scoped, tag = 'internal scratch']
  %s0 = inlined_call_operand.vmem [shape: f32[4,128], index: 0, kind: input, shape index: {}]
  %s1 = inlined_call_operand.vmem [shape: f32[128,4], index: 1, kind: input, shape index: {}]
  %s2 = inlined_call_operand.vmem [shape: f32[4,128], index: 2, kind: input, shape index: {}]
  %s3 = inlined_call_operand.vmem [shape: f32[4,128], index: 3, kind: input, shape index: {}]
  %s4 = inlined_call_operand.hbm [shape: f32[4,128], index: 4, kind: output, shape index: {}]
  %s5 = sld [smem:[#allocation0]]
  $region26: #{tpu_custom_call.1} parent=0
    _
  %s7 = ssub.s32 1, %s5
  %s8 = scalar_select 0, %s7, %s5
  $region1: #{tpu_custom_call.1} parent=0
    #allocation2 [shape = 'u8[2048]{0}', space=vmem, size = 0x800, scoped, tag = 'output window, operand 0, single buffered']
    #allocation3 [shape = 's32[1]{0}', space=sflag, size = 0x4, scoped, tag = 'scoped memory for tpu_custom_call.1']
    %9 = vsyncpa [#allocation3], 0
    // Predicated region
    $region2: #{tpu_custom_call.1} parent=1 // pred_check
      _
    $region3: #{tpu_custom_call.1} parent=1 // pred_check_branch
      %11 = sbr.rel (0) target = $region5
    $region4: #{tpu_custom_call.1} parent=1 // pred_region
      _
    $region5: #{tpu_custom_call.1} parent=1 // pred_fallthru
      _
    // Predicated region
    $region6: #{tpu_custom_call.1} parent=1 // pred_check
      _
    $region7: #{tpu_custom_call.1} parent=1 // pred_check_branch
      %13 = sbr.rel (0) target = $region9
    $region8: #{tpu_custom_call.1} parent=1 // pred_region
      _
    $region9: #{tpu_custom_call.1} parent=1 // pred_fallthru
      _
    // Predicated region
    $region10: #{tpu_custom_call.1} parent=1 // pred_check
      _
    $region11: #{tpu_custom_call.1} parent=1 // pred_check_branch
      %15 = sbr.rel (0) target = $region13
    $region12: #{tpu_custom_call.1} parent=1 // pred_region
      _
    $region13: #{tpu_custom_call.1} parent=1 // pred_fallthru
      _
    // Predicated region
    $region14: #{tpu_custom_call.1} parent=1 // pred_check
      _
    $region15: #{tpu_custom_call.1} parent=1 // pred_check_branch
      %17 = sbr.rel (0) target = $region17
    $region16: #{tpu_custom_call.1} parent=1 // pred_region
      _
    $region17: #{tpu_custom_call.1} parent=1 // pred_fallthru
      _
    %v18 = vld [vmem:[%s0] sm:$0xf]
    %v19 = vld [vmem:[%s1] sm:$0xff]
    %v20 = vld [vmem:[%s1 + $0x8] sm:$0xff]
    %v21 = vld [vmem:[%s1 + $0x10] sm:$0xff]
    %v22 = vld [vmem:[%s1 + $0x18] sm:$0xff]
    %v23 = vld [vmem:[%s1 + $0x20] sm:$0xff]
    %v24 = vld [vmem:[%s1 + $0x28] sm:$0xff]
    %v25 = vld [vmem:[%s1 + $0x30] sm:$0xff]
    %v26 = vld [vmem:[%s1 + $0x38] sm:$0xff]
    %v27 = vld [vmem:[%s1 + $0x40] sm:$0xff]
    %v28 = vld [vmem:[%s1 + $0x48] sm:$0xff]
    %v29 = vld [vmem:[%s1 + $0x50] sm:$0xff]
    %v30 = vld [vmem:[%s1 + $0x58] sm:$0xff]
    %v31 = vld [vmem:[%s1 + $0x60] sm:$0xff]
    %v32 = vld [vmem:[%s1 + $0x68] sm:$0xff]
    %v33 = vld [vmem:[%s1 + $0x70] sm:$0xff]
    %v34 = vld [vmem:[%s1 + $0x78] sm:$0xff]
    %35 = vmatpush.msra.mxu0 %v34
    %36 = vmatpush.msra.mxu0 %v33
    %37 = vmatpush.msra.mxu0 %v32
    %38 = vmatpush.msra.mxu0 %v31
    %39 = vmatpush.msra.mxu0 %v30
    %40 = vmatpush.msra.mxu0 %v29
    %41 = vmatpush.msra.mxu0 %v28
    %42 = vmatpush.msra.mxu0 %v27
    %43 = vmatpush.msra.mxu0 %v26
    %44 = vmatpush.msra.mxu0 %v25
    %45 = vmatpush.msra.mxu0 %v24
    %46 = vmatpush.msra.mxu0 %v23
    %47 = vmatpush.msra.mxu0 %v22
    %48 = vmatpush.msra.mxu0 %v21
    %49 = vmatpush.msra.mxu0 %v20
    %50 = vmatpush.msra.mxu0 %v19
    %51 = vmatmul.f32.gmra.mxu0 %v18
    %v52 = vpop.f32.mrf.mxu0
    %v53 = vadd.f32 0.0, %v52
    %54 = vdwg.mxu0
    %v55 = vld [vmem:[%s2] sm:$0xf]
    %vm56 = vcmask 31744
    %v58 = vsel %vm56, %v53, 0
    %vm60 = vcmask 1043456
    %v62 = vsel %vm60, %v55, 0
    %64 = vmatpush.msra.mxu0 0.0
    %65 = vmatpush.msra.mxu0 0.0
    %66 = vmatpush.msra.mxu0 0.0
    %67 = vmatpush.msra.mxu0 0.0
    %68 = vmatpush.msra.mxu0 0.0
    %69 = vmatpush.msra.mxu0 0.0
    %70 = vmatpush.msra.mxu0 0.0
    %71 = vmatpush.msra.mxu0 0.0
    %72 = vmatpush.msra.mxu0 0.0
    %73 = vmatpush.msra.mxu0 0.0
    %74 = vmatpush.msra.mxu0 0.0
    %75 = vmatpush.msra.mxu0 0.0
    %76 = vmatpush.msra.mxu0 0.0
    %77 = vmatpush.msra.mxu0 0.0
    %78 = vmatpush.msra.mxu0 0.0
    %79 = vmatpush.msra.mxu0 %v62
    %80 = vmatmul.f32.gmra.mxu0 %v58
    %v81 = vpop.f32.mrf.mxu0
    %v82 = vadd.f32 0.0, %v81
    %83 = vdwg.mxu0
    %v84 = vsub.f32 %v18, %v82
    %v85 = vmul.f32 %v84, %v84
    %86 = vmatpush.msra.mxu0 %v34
    %87 = vmatpush.msra.mxu0 %v33
    %88 = vmatpush.msra.mxu0 %v32
    %89 = vmatpush.msra.mxu0 %v31
    %90 = vmatpush.msra.mxu0 %v30
    %91 = vmatpush.msra.mxu0 %v29
    %92 = vmatpush.msra.mxu0 %v28
    %93 = vmatpush.msra.mxu0 %v27
    %94 = vmatpush.msra.mxu0 %v26
    %95 = vmatpush.msra.mxu0 %v25
    %96 = vmatpush.msra.mxu0 %v24
    %97 = vmatpush.msra.mxu0 %v23
    %98 = vmatpush.msra.mxu0 %v22
    %99 = vmatpush.msra.mxu0 %v21
    %100 = vmatpush.msra.mxu0 %v20
    %101 = vmatpush.msra.mxu0 %v19
    %102 = vmatmul.f32.gmra.mxu0 %v85
    %v103 = vpop.f32.mrf.mxu0
    %v104 = vadd.f32 1e-05, %v103
    %105 = vdwg.mxu0
    %v106 = vrsqrt.pop %v104
    %v107 = vmul.f32 %v106, %v104
    %v108 = vmul.f32 %v107, %v106
    %v109 = vmul.f32 0.5, %v108
    %v110 = vsub.f32 1.5, %v109
    %v111 = vmul.f32 %v106, %v110
    %vm112 = vweird.f32 %v104
    %vm113 = vweird.f32 %v106
    %vm114 = vmor %vm112, %vm113
    %v115 = vsel %vm114, %v106, %v111
    %v116 = vld [vmem:[%s3] sm:$0xf]
    %v118 = vsel %vm56, %v115, 0
    %v121 = vsel %vm60, %v116, 0
    %123 = vmatpush.msra.mxu0 0.0
    %124 = vmatpush.msra.mxu0 0.0
    %125 = vmatpush.msra.mxu0 0.0
    %126 = vmatpush.msra.mxu0 0.0
    %127 = vmatpush.msra.mxu0 0.0
    %128 = vmatpush.msra.mxu0 0.0
    %129 = vmatpush.msra.mxu0 0.0
    %130 = vmatpush.msra.mxu0 0.0
    %131 = vmatpush.msra.mxu0 0.0
    %132 = vmatpush.msra.mxu0 0.0
    %133 = vmatpush.msra.mxu0 0.0
    %134 = vmatpush.msra.mxu0 0.0
    %135 = vmatpush.msra.mxu0 0.0
    %136 = vmatpush.msra.mxu0 0.0
    %137 = vmatpush.msra.mxu0 0.0
    %138 = vmatpush.msra.mxu0 %v121
    %139 = vmatmul.f32.gmra.mxu0 %v118
    %v140 = vpop.f32.mrf.mxu0
    %v141 = vadd.f32 0.0, %v140
    %142 = vdwg.mxu0
    %v143 = vmul.f32 %v84, %v141
    %144 = vst [vmem:[#allocation2] sm:$0xf] %v143
    // Predicated region
    $region18: #{tpu_custom_call.1} parent=1 // pred_check
      _
    $region19: #{tpu_custom_call.1} parent=1 // pred_check_branch
      %146 = sbr.rel (0) target = $region21
    $region20: #{tpu_custom_call.1} parent=1 // pred_region
      %148 = vsyncadd [#allocation3], 0
      %s150 = sshll.u32 [#allocation2], 4
      %s151 = int_to_ptr.vmem [resolvable:$true] %s150
      %s152 = sshll.u32 %s4, 4
      %s153 = int_to_ptr.hbm [resolvable:$true] %s152
      %155 = dma.vmem_to_hbm [thread:$0]  %s151, 64, %s153, [#allocation3]
    $region21: #{tpu_custom_call.1} parent=1 // pred_fallthru
      _
    // Predicated region
    $region22: #{tpu_custom_call.1} parent=1 // pred_check
      _
    $region23: #{tpu_custom_call.1} parent=1 // pred_check_branch
      %157 = sbr.rel (0) target = $region25
    $region24: #{tpu_custom_call.1} parent=1 // pred_region
      %159 = dma.done [#allocation3], 64
    $region25: #{tpu_custom_call.1} parent=1 // pred_fallthru
      _
    %160 = vsyncpa [#allocation3], 1

</llo_original>
